<compile_context>
chip_gen: v5e
topology: v5e:2x2
jax: 0.10.0
libtpu: 0.0.40
codegen_flags: <defaults>
</compile_context>

<pallas_src>
import jax
import jax.numpy as jnp
from jax.experimental import pallas as pl
from jax.experimental.pallas import tpu as pltpu

_LANES = 128
_MAX_ROW_TILE = 1024          # 1024 x 128 x 4B = 512 KiB per input per buffer
_ACC_ROWS = 8                 # accumulator is one (8, 128) f32 vreg tile


def _round_up(x: int, m: int) -> int:
    return ((x + m - 1) // m) * m


def _pick_row_tile(rows: int) -> int:
    """Largest multiple-of-8 divisor of `rows` that is <= _MAX_ROW_TILE (0 if none)."""
    best = 0
    for d in range(8, min(rows, _MAX_ROW_TILE) + 1, 8):
        if rows % d == 0:
            best = d
    return best


def _in_index_map(inner_tiles: int):
    def index_map(p, i):
        return (p * inner_tiles + i, 0)
    return index_map


def _mse_kernel(yp_ref, yt_ref, o_ref, acc_ref):
    # Reset the vector accumulator at the start of each reduction sweep.
    @pl.when(pl.program_id(1) == 0)
    def _():
        acc_ref[...] = jnp.zeros_like(acc_ref)

    d = yp_ref[...].astype(jnp.float32) - yt_ref[...].astype(jnp.float32)
    sq = d * d
    # Sublane fold: (row_tile, 128) -> (row_tile//8, 8, 128) -> sum -> (8, 128).
    # Pure VPU adds; no per-step cross-lane work, no scalar dependency chain.
    acc_ref[...] += jnp.sum(sq.reshape(-1, _ACC_ROWS, _LANES), axis=0)

    # Emit this sweep's partial sums once, on the last reduction step.
    @pl.when(pl.program_id(1) == pl.num_programs(1) - 1)
    def _():
        o_ref[...] = acc_ref[...]


def mse_pallas(y_pred: jax.Array, y_true: jax.Array) -> jax.Array:
    """((y_pred - y_true) ** 2).mean() computed with a Pallas TPU kernel."""
    assert y_pred.shape == y_true.shape, "shapes must match (no broadcasting)"
    n = y_pred.size
    out_dtype = jnp.result_type(y_pred.dtype, y_true.dtype)

    yp = jnp.ravel(y_pred)
    yt = jnp.ravel(y_true)

    row_tile = 0
    rows = 0
    if n % _LANES == 0:
        rows = n // _LANES
        row_tile = _pick_row_tile(rows)

    if row_tile == 0:
        # Rare fallback: zero-pad so blocks tile the slab exactly. Identical
        # zero padding on both inputs adds 0 to the squared-difference sum.
        rows_needed = pl.cdiv(n, _LANES)
        row_tile = min(_MAX_ROW_TILE, _round_up(rows_needed, _ACC_ROWS))
        rows = _round_up(rows_needed, row_tile)
        pad = rows * _LANES - n
        yp = jnp.pad(yp, (0, pad))
        yt = jnp.pad(yt, (0, pad))

    yp2 = yp.reshape(rows, _LANES)
    yt2 = yt.reshape(rows, _LANES)
    num_tiles = rows // row_tile

    # 2-way outer split lets megacore parts (v7x) drive both TensorCores for
    # this HBM-bound reduction; on 1-TC chips it is just two sequential sweeps.
    num_par = 2 if (num_tiles >= 2 and num_tiles % 2 == 0) else 1
    inner_tiles = num_tiles // num_par
    idx_map = _in_index_map(inner_tiles)

    partials = pl.pallas_call(
        _mse_kernel,
        out_shape=jax.ShapeDtypeStruct((num_par * _ACC_ROWS, _LANES), jnp.float32),
        grid_spec=pltpu.PrefetchScalarGridSpec(
            num_scalar_prefetch=0,
            grid=(num_par, inner_tiles),
            in_specs=[
                pl.BlockSpec((row_tile, _LANES), idx_map),
                pl.BlockSpec((row_tile, _LANES), idx_map),
            ],
            out_specs=pl.BlockSpec((_ACC_ROWS, _LANES), lambda p, i: (p, 0)),
            scratch_shapes=[pltpu.VMEM((_ACC_ROWS, _LANES), jnp.float32)],
        ),
        compiler_params=pltpu.CompilerParams(
            dimension_semantics=("parallel", "arbitrary"),
        ),
    )(yp2, yt2)

    # Tiny final reduction of the (num_par*8, 128) partial sums + mean divide.
    return (jnp.sum(partials) * (1.0 / n)).astype(out_dtype)


if __name__ == "__main__":
    key = jax.random.PRNGKey(0)
    k1, k2 = jax.random.split(key)

    shape = (2, 4, 16, 16)  # NCHW, as the PyTorch module would see
    y_pred = jax.random.normal(k1, shape, dtype=jnp.float32)
    y_true = jax.random.normal(k2, shape, dtype=jnp.float32)

    result = mse_pallas(y_pred, y_true)
    jax.block_until_ready(result)

    # Reference check in plain JAX.
    ref = jnp.mean((y_pred - y_true) ** 2)
    assert jnp.allclose(result, ref, rtol=1e-5, atol=1e-6), (result, ref)

    print("KERNEL_OK")
</pallas_src>

<mosaic_0001>
module attributes {stable_mosaic.version = 11 : i64} {
  func.func @_mse_kernel(%arg0: i32, %arg1: i32, %arg2: memref<16x128xf32, #tpu.memory_space<vmem>>, %arg3: memref<16x128xf32, #tpu.memory_space<vmem>>, %arg4: memref<8x128xf32, #tpu.memory_space<vmem>>, %arg5: memref<8x128xf32, #tpu.memory_space<vmem>>) attributes {dimension_semantics = [#tpu.dimension_semantics<parallel>, #tpu.dimension_semantics<arbitrary>], iteration_bounds = array<i64: 1, 1>, scalar_prefetch = 0 : i64, scratch_operands = 1 : i64, tpu.core_type = #tpu.core_type<tc>, window_params = [{transform_indices = @transform_0, window_bounds = array<i64: 16, 128>}, {transform_indices = @transform_1, window_bounds = array<i64: 16, 128>}, {transform_indices = @transform_2, window_bounds = array<i64: 8, 128>}]} {
    %c0_i32 = arith.constant 0 : i32
    %0 = arith.cmpi eq, %arg1, %c0_i32 : i32
    %1 = arith.extui %0 : i1 to i32
    %c0_i32_0 = arith.constant 0 : i32
    %2 = arith.cmpi ne, %1, %c0_i32_0 : i32
    scf.if %2 {
      %cst_10 = arith.constant 0.000000e+00 : f32
      %15 = vector.broadcast %cst_10 : f32 to vector<8x128xf32>
      %c0_11 = arith.constant 0 : index
      %c0_12 = arith.constant 0 : index
      %16 = vector.load %arg5[%c0_11, %c0_12] : memref<8x128xf32, #tpu.memory_space<vmem>>, vector<8x128xf32>
      tpu.vector_store %arg5[%c0_11, %c0_12], %15 {strides = array<i32>} : memref<8x128xf32, #tpu.memory_space<vmem>>, vector<8x128xf32>,
    } else {
    }
    %c0 = arith.constant 0 : index
    %c0_1 = arith.constant 0 : index
    %3 = vector.load %arg2[%c0, %c0_1] : memref<16x128xf32, #tpu.memory_space<vmem>>, vector<16x128xf32>
    %c0_2 = arith.constant 0 : index
    %c0_3 = arith.constant 0 : index
    %4 = vector.load %arg3[%c0_2, %c0_3] : memref<16x128xf32, #tpu.memory_space<vmem>>, vector<16x128xf32>
    %5 = arith.subf %3, %4 : vector<16x128xf32>
    %6 = arith.mulf %5, %5 : vector<16x128xf32>
    %c0_4 = arith.constant 0 : index
    %c0_5 = arith.constant 0 : index
    %7 = vector.load %arg5[%c0_4, %c0_5] : memref<8x128xf32, #tpu.memory_space<vmem>>, vector<8x128xf32>
    %8 = vector.shape_cast %6 : vector<16x128xf32> to vector<2x8x128xf32>
    %cst = arith.constant dense<0.000000e+00> : vector<8x128xf32>
    %9 = vector.multi_reduction <add>, %8, %cst [0] : vector<2x8x128xf32> to vector<8x128xf32>
    %10 = arith.addf %7, %9 : vector<8x128xf32>
    %c0_6 = arith.constant 0 : index
    %c0_7 = arith.constant 0 : index
    %11 = vector.load %arg5[%c0_6, %c0_7] : memref<8x128xf32, #tpu.memory_space<vmem>>, vector<8x128xf32>
    tpu.vector_store %arg5[%c0_6, %c0_7], %10 {strides = array<i32>} : memref<8x128xf32, #tpu.memory_space<vmem>>, vector<8x128xf32>,
    %c0_i32_8 = arith.constant 0 : i32
    %12 = arith.cmpi eq, %arg1, %c0_i32_8 : i32
    %13 = arith.extui %12 : i1 to i32
    %c0_i32_9 = arith.constant 0 : i32
    %14 = arith.cmpi ne, %13, %c0_i32_9 : i32
    scf.if %14 {
      %c0_10 = arith.constant 0 : index
      %c0_11 = arith.constant 0 : index
      %15 = vector.load %arg5[%c0_10, %c0_11] : memref<8x128xf32, #tpu.memory_space<vmem>>, vector<8x128xf32>
      %c0_12 = arith.constant 0 : index
      %c0_13 = arith.constant 0 : index
      %16 = vector.load %arg4[%c0_12, %c0_13] : memref<8x128xf32, #tpu.memory_space<vmem>>, vector<8x128xf32>
      tpu.vector_store %arg4[%c0_12, %c0_13], %15 {strides = array<i32>} : memref<8x128xf32, #tpu.memory_space<vmem>>, vector<8x128xf32>,
    } else {
    }
    return
  }
  func.func @transform_0(%arg0: i32, %arg1: i32) -> (i32, i32) {
    %c1_i32 = arith.constant 1 : i32
    %0 = arith.muli %arg0, %c1_i32 : i32
    %1 = arith.addi %0, %arg1 : i32
    %c0_i32 = arith.constant 0 : i32
    %c0_i32_0 = arith.constant 0 : i32
    return %1, %c0_i32 : i32, i32
  }
  func.func @transform_1(%arg0: i32, %arg1: i32) -> (i32, i32) {
    %c1_i32 = arith.constant 1 : i32
    %0 = arith.muli %arg0, %c1_i32 : i32
    %1 = arith.addi %0, %arg1 : i32
    %c0_i32 = arith.constant 0 : i32
    %c0_i32_0 = arith.constant 0 : i32
    return %1, %c0_i32 : i32, i32
  }
  func.func @transform_2(%arg0: i32, %arg1: i32) -> (i32, i32) {
    %c0_i32 = arith.constant 0 : i32
    %c0_i32_0 = arith.constant 0 : i32
    return %arg0, %c0_i32 : i32, i32
  }
}

</mosaic_0001>

<llo_original>
// kernel: tpu_custom_call.1
$region0: #{tpu_custom_call.1}
  #allocation0 [shape = 'u32[]', space=smem, size = 0x4, offset = 0x4, fixed_abs, tag = 'smem constant byte address 0x4 - core index']
  #allocation1 [shape = 'u32[72,128]{1,0:T(1,128)}', space=vmem, size = 0x9000, scoped, tag = 'internal scratch']
  #allocation2 [shape = 'f32[8,128]{1,0:T(8,128)}', space=vmem, size = 0x1000, scoped, tag = 'scratch operand']
  %s0 = inlined_call_operand.hbm [shape: f32[16,128], index: 0, kind: input, shape index: {}]
  %s1 = inlined_call_operand.hbm [shape: f32[16,128], index: 1, kind: input, shape index: {}]
  %s2 = inlined_call_operand.hbm [shape: f32[8,128], index: 2, kind: output, shape index: {}]
  %s3 = sld [smem:[#allocation0]]
  $region34: #{tpu_custom_call.1} parent=0
    _
  %s5 = ssub.s32 1, %s3
  %s6 = scalar_select 0, %s5, %s3
  $region1: #{tpu_custom_call.1} parent=0
    #allocation3 [shape = 'u8[8192]{0}', space=vmem, size = 0x2000, scoped, tag = 'input window, operand 0, single buffered']
    #allocation4 [shape = 's32[1]{0}', space=sflag, size = 0x4, scoped, tag = 'scoped memory for tpu_custom_call.1']
    #allocation5 [shape = 's32[1]{0}', space=sflag, size = 0x4, scoped, tag = 'scoped memory for tpu_custom_call.1']
    #allocation6 [shape = 'u8[8192]{0}', space=vmem, size = 0x2000, scoped, tag = 'input window, operand 1, single buffered']
    #allocation7 [shape = 's32[1]{0}', space=sflag, size = 0x4, scoped, tag = 'scoped memory for tpu_custom_call.1']
    #allocation8 [shape = 'u8[4096]{0}', space=vmem, size = 0x1000, scoped, tag = 'output window, operand 0, single buffered']
    %7 = vsyncpa [#allocation4], 0
    %8 = vsyncpa [#allocation7], 0
    %9 = vsyncpa [#allocation5], 0
    // Predicated region
    $region2: #{tpu_custom_call.1} parent=1 // pred_check
      _
    $region3: #{tpu_custom_call.1} parent=1 // pred_check_branch
      %11 = sbr.rel (0) target = $region5
    $region4: #{tpu_custom_call.1} parent=1 // pred_region
      %s12 = sadd.s32 0, 0
      %s13 = smul.u32 2, %s12
      %15 = vsyncadd [#allocation4], 0
      %s16 = smul.addr %s13, 8
      %s17 = scalar_lea.hbm %s0, %s16
      %s18 = sshll.u32 %s17, 4
      %s19 = int_to_ptr.hbm [resolvable:$true] %s18
      %s20 = sshll.u32 [#allocation3], 4
      %s21 = int_to_ptr.vmem [resolvable:$true] %s20
      %26 = dma.hbm_to_vmem [thread:$0]  %s19, 256, %s21, [#allocation4], 128, 128, 8
    $region5: #{tpu_custom_call.1} parent=1 // pred_fallthru
      _
    // Predicated region
    $region6: #{tpu_custom_call.1} parent=1 // pred_check
      _
    $region7: #{tpu_custom_call.1} parent=1 // pred_check_branch
      %28 = sbr.rel (0) target = $region9
    $region8: #{tpu_custom_call.1} parent=1 // pred_region
      %s29 = sadd.s32 0, 0
      %s30 = smul.u32 2, %s29
      %32 = vsyncadd [#allocation7], 0
      %s33 = smul.addr %s30, 8
      %s34 = scalar_lea.hbm %s1, %s33
      %s35 = sshll.u32 %s34, 4
      %s36 = int_to_ptr.hbm [resolvable:$true] %s35
      %s37 = sshll.u32 [#allocation6], 4
      %s38 = int_to_ptr.vmem [resolvable:$true] %s37
      %43 = dma.hbm_to_vmem [thread:$0]  %s36, 256, %s38, [#allocation7], 128, 128, 8
    $region9: #{tpu_custom_call.1} parent=1 // pred_fallthru
      _
    // Predicated region
    $region10: #{tpu_custom_call.1} parent=1 // pred_check
      _
    $region11: #{tpu_custom_call.1} parent=1 // pred_check_branch
      %45 = sbr.rel (0) target = $region13
    $region12: #{tpu_custom_call.1} parent=1 // pred_region
      %47 = dma.done [#allocation4], 256
    $region13: #{tpu_custom_call.1} parent=1 // pred_fallthru
      _
    // Predicated region
    $region14: #{tpu_custom_call.1} parent=1 // pred_check
      _
    $region15: #{tpu_custom_call.1} parent=1 // pred_check_branch
      %49 = sbr.rel (0) target = $region17
    $region16: #{tpu_custom_call.1} parent=1 // pred_region
      %51 = dma.done [#allocation7], 256
    $region17: #{tpu_custom_call.1} parent=1 // pred_fallthru
      _
    %s52 = sadd.s32 0, 0
    %s53 = smul.u32 2, %s52
    %s54 = sadd.s32 0, 0
    %s55 = smul.u32 2, %s54
    %p56 = scmp.eq.s32.totalorder 0, 0
    // Predicated region
    $region18: #{tpu_custom_call.1} parent=1 // pred_check
      %p57 = pneg %p56
    $region19: #{tpu_custom_call.1} parent=1 // pred_check_branch
      %59 = sbr.rel (%p57) target = $region21
    $region20: #{tpu_custom_call.1} parent=1 // pred_region
      %60 = vst [vmem:[#allocation2] sm:$0xff] 0.0
    $region21: #{tpu_custom_call.1} parent=1 // pred_fallthru
      _
    %v61 = vld [vmem:[#allocation3] sm:$0xff]
    %v62 = vld [vmem:[#allocation3 + $0x8] sm:$0xff]
    %v63 = vld [vmem:[#allocation6] sm:$0xff]
    %v64 = vld [vmem:[#allocation6 + $0x8] sm:$0xff]
    %v65 = vsub.f32 %v61, %v63
    %v66 = vsub.f32 %v62, %v64
    %v67 = vmul.f32 %v65, %v65
    %v68 = vmul.f32 %v66, %v66
    %v69 = vld [vmem:[#allocation2] sm:$0xff]
    %v70 = vadd.f32 %v67, %v68
    %v71 = vadd.f32 %v69, %v70
    %72 = vst [vmem:[#allocation2] sm:$0xff] %v71
    // Predicated region
    $region22: #{tpu_custom_call.1} parent=1 // pred_check
      %p73 = pneg %p56
    $region23: #{tpu_custom_call.1} parent=1 // pred_check_branch
      %75 = sbr.rel (%p73) target = $region25
    $region24: #{tpu_custom_call.1} parent=1 // pred_region
      %v76 = vld [vmem:[#allocation2] sm:$0xff]
      %77 = vst [vmem:[#allocation8] sm:$0xff] %v76
    $region25: #{tpu_custom_call.1} parent=1 // pred_fallthru
      _
    // Predicated region
    $region26: #{tpu_custom_call.1} parent=1 // pred_check
      _
    $region27: #{tpu_custom_call.1} parent=1 // pred_check_branch
      %79 = sbr.rel (0) target = $region29
    $region28: #{tpu_custom_call.1} parent=1 // pred_region
      %81 = vsyncadd [#allocation5], 0
      %s83 = sshll.u32 [#allocation8], 4
      %s84 = int_to_ptr.vmem [resolvable:$true] %s83
      %s85 = sshll.u32 %s2, 4
      %s86 = int_to_ptr.hbm [resolvable:$true] %s85
      %88 = dma.vmem_to_hbm [thread:$0]  %s84, 128, %s86, [#allocation5]
    $region29: #{tpu_custom_call.1} parent=1 // pred_fallthru
      _
    // Predicated region
    $region30: #{tpu_custom_call.1} parent=1 // pred_check
      _
    $region31: #{tpu_custom_call.1} parent=1 // pred_check_branch
      %90 = sbr.rel (0) target = $region33
    $region32: #{tpu_custom_call.1} parent=1 // pred_region
      %92 = dma.done [#allocation5], 128
    $region33: #{tpu_custom_call.1} parent=1 // pred_fallthru
      _
    %93 = vsyncpa [#allocation4], 1
    %94 = vsyncpa [#allocation7], 1
    %95 = vsyncpa [#allocation5], 1

</llo_original>
